<compile_context>
chip_gen: v6e
topology: v6e:2x2x1
jax: 0.10.0
libtpu: 0.0.40
codegen_flags: <defaults>
</compile_context>

<pallas_src>
import jax
import jax.numpy as jnp
from jax.experimental import pallas as pl
from jax.experimental.pallas import tpu as pltpu


LEAKY = 0.2


def _cdiv(a, b):
    return -(-a // b)


def _round_up(a, b):
    return _cdiv(a, b) * b


def _choose_tiles(batch, max_tile=2048, split_threshold=512):
    """Pick (n_tiles, tile_b) for the batch grid.

    - tiles up to `max_tile` rows (amortize ~0.35us per-step overhead),
    - at least 2 (and an even number of) grid steps once the batch is large
      enough, so dimension_semantics=("parallel",) can shard across v7x's 2 TCs,
    - tile_b rounded to a multiple of 8 and re-derived from B so the last tile
      is nearly full (caps batch-padding waste at <1 sublane group per tile).
    """
    n_tiles = max(1, _cdiv(batch, max_tile))
    if batch >= split_threshold:
        n_tiles = max(n_tiles, 2)
    if n_tiles > 1 and n_tiles % 2:
        n_tiles += 1
    tile_b = _round_up(_cdiv(batch, n_tiles), 8)
    n_tiles = _cdiv(batch, tile_b)
    return n_tiles, tile_b


def disc_kernel(x_ref, y_ref,
                w1x_ref, w1y_ref, b1_ref,
                w2_ref, b2_ref,
                w3_ref, b3_ref,
                o_ref):
    # x arrives as the original f32 HBM stream; cast to bf16 in-VMEM (VPU op,
    # kernel is HBM-bound so this is free) right before the MXU dots.
    x = x_ref[...].astype(jnp.bfloat16)          # (TB, d_in)
    y = y_ref[...].astype(jnp.bfloat16)          # (TB, d_label)

    # layer 1 (label embedding already folded into w1y_ref / b1_ref)
    h1 = (jnp.dot(x, w1x_ref[...], preferred_element_type=jnp.float32)
          + jnp.dot(y, w1y_ref[...], preferred_element_type=jnp.float32)
          + b1_ref[...])
    h1 = jnp.where(h1 > 0, h1, LEAKY * h1)       # f32 VPU

    # layer 2
    h2 = (jnp.dot(h1.astype(jnp.bfloat16), w2_ref[...],
                  preferred_element_type=jnp.float32)
          + b2_ref[...])
    h2 = jnp.where(h2 > 0, h2, LEAKY * h2)

    # output layer: Linear(hidden, 1) as broadcast-mul + lane reduce
    # (keeps the degenerate N=1 matmul off the MXU; w3 passed as (1, hidden)).
    logits = jnp.sum(h2 * w3_ref[...], axis=-1) + b3_ref[0, 0]   # (TB,)

    # dropout (eval mode) == identity; store lane-dense (1, 1, TB) row.
    o_ref[...] = logits.reshape(1, 1, -1).astype(o_ref.dtype)


def prepare_params(params, d_in):
    """One-time prep: fold the label embedding into layer 1, transpose w3 to a
    row, cast matmul weights to bf16. No d_in padding (x is consumed as-is)."""
    hidden, d_out = params["w3"].shape
    assert d_out == 1, "reduction-based output layer assumes d_out == 1"

    # exact algebraic fold of the label-embedding Linear into layer 1
    w1y_eff = params["we"] @ params["w1y"]                    # (d_label, hidden)
    b1_eff = params["be"] @ params["w1y"] + params["b1"]      # (1, hidden)

    return {
        "d_in": d_in,
        "hidden": hidden,
        "d_label": w1y_eff.shape[0],
        "w1x": params["w1x"].astype(jnp.bfloat16),            # (d_in, hidden)
        "w1y": w1y_eff.astype(jnp.bfloat16),                   # (d_label, hidden)
        "b1": b1_eff.astype(jnp.float32),
        "w2": params["w2"].astype(jnp.bfloat16),
        "b2": params["b2"].astype(jnp.float32),
        "w3": params["w3"].T.astype(jnp.float32),              # (1, hidden)
        "b3": params["b3"].reshape(1, 1).astype(jnp.float32),  # SMEM scalar
    }


def discriminator_forward(x, y, kp, tile_b=None):
    """x: (B, d_in) f32, y: (B, d_label) f32 -> logits (B, 1) f32."""
    B = x.shape[0]
    d_in, hidden, d_label = kp["d_in"], kp["hidden"], kp["d_label"]

    if tile_b is None:
        n_tiles, tile_b = _choose_tiles(B)
    else:
        tile_b = _round_up(tile_b, 8)
        n_tiles = _cdiv(B, tile_b)

    # x / y go straight in (no wrapper pad/cast pass). If B is not a multiple
    # of tile_b, the final grid step relies on Pallas boundary padding for the
    # input reads; those tail rows are sliced off below.
    res = lambda i: (0, 0)   # resident weight blocks (constant index -> DMA once)
    # (weights keep default double-buffering: the extra ~0.7 MB of VMEM is
    #  negligible under the 48 MiB limit, and Mosaic only DMAs them once.)

    out = pl.pallas_call(
        disc_kernel,
        out_shape=jax.ShapeDtypeStruct((n_tiles, 1, tile_b), jnp.float32),
        grid=(n_tiles,),
        in_specs=[
            pl.BlockSpec((tile_b, d_in), lambda i: (i, 0)),       # x tile (f32)
            pl.BlockSpec((tile_b, d_label), lambda i: (i, 0)),    # y tile (f32)
            pl.BlockSpec((d_in, hidden), res),                    # w1x  bf16
            pl.BlockSpec((d_label, hidden), res),                 # folded w1y
            pl.BlockSpec((1, hidden), res),                       # folded b1
            pl.BlockSpec((hidden, hidden), res),                  # w2   bf16
            pl.BlockSpec((1, hidden), res),                       # b2
            pl.BlockSpec((1, hidden), res),                       # w3 row
            pl.BlockSpec(memory_space=pltpu.MemorySpace.SMEM),    # b3 scalar
        ],
        out_specs=pl.BlockSpec((1, 1, tile_b), lambda i: (i, 0, 0)),
        compiler_params=pltpu.CompilerParams(
            dimension_semantics=("parallel",),
            # > v5e's 16 MiB scoped default (needed for 1024-2048 row tiles),
            # < v7x's 64 MiB physical VMEM.
            vmem_limit_bytes=48 * 1024 * 1024),
    )(x, y, kp["w1x"], kp["w1y"], kp["b1"],
      kp["w2"], kp["b2"], kp["w3"], kp["b3"])

    # lane-dense (n_tiles, 1, tile_b) -> (B, 1); tail padding rows dropped.
    return out.reshape(n_tiles * tile_b, 1)[:B]


def init_params(key, d_in=784, d_label=10, hidden=256, d_out=1):
    """Deterministic init mimicking nn.Linear (U[-1/sqrt(fan_in), 1/sqrt(fan_in)]).
    Weights stored as (in, out); W1 is pre-split into W1x / W1y."""
    ks = jax.random.split(key, 8)

    def lin(kw, kb, fan_in, fan_out):
        bound = 1.0 / jnp.sqrt(jnp.float32(fan_in))
        w = jax.random.uniform(kw, (fan_in, fan_out), jnp.float32, -bound, bound)
        b = jax.random.uniform(kb, (1, fan_out), jnp.float32, -bound, bound)
        return w, b

    we, be = lin(ks[0], ks[1], d_label, hidden)
    w1, b1 = lin(ks[2], ks[3], d_in + hidden, hidden)
    w2, b2 = lin(ks[4], ks[5], hidden, hidden)
    w3, b3 = lin(ks[6], ks[7], hidden, d_out)

    return {
        "we": we, "be": be,
        "w1x": w1[:d_in, :], "w1y": w1[d_in:, :], "b1": b1,
        "w2": w2, "b2": b2,
        "w3": w3, "b3": b3,
    }


def reference_forward(x, y, params):
    """Pure-JAX f32 reference replicating the PyTorch forward (eval mode)."""
    y_emb = y @ params["we"] + params["be"]
    h1 = x @ params["w1x"] + y_emb @ params["w1y"] + params["b1"]
    h1 = jnp.where(h1 > 0, h1, LEAKY * h1)
    h2 = h1 @ params["w2"] + params["b2"]
    h2 = jnp.where(h2 > 0, h2, LEAKY * h2)
    return h2 @ params["w3"] + params["b3"]


if __name__ == "__main__":
    # Module-consistent small shapes: batch=8, d_in=784, d_label=10,
    # hidden=256, d_out=1.
    B, D_IN, D_LABEL, HIDDEN, D_OUT = 8, 784, 10, 256, 1

    key = jax.random.PRNGKey(0)
    k_params, k_x, k_y = jax.random.split(key, 3)

    params = init_params(k_params, D_IN, D_LABEL, HIDDEN, D_OUT)
    kparams = prepare_params(params, D_IN)

    x = jax.random.normal(k_x, (B, D_IN), jnp.float32)
    # one-hot style labels as float32 (matches y.to(dtype=torch.float32))
    labels = jax.random.randint(k_y, (B,), 0, D_LABEL)
    y = jax.nn.one_hot(labels, D_LABEL, dtype=jnp.float32)

    out = jax.block_until_ready(discriminator_forward(x, y, kparams))

    ref = reference_forward(x, y, params)
    assert out.shape == (B, D_OUT), out.shape
    max_err = float(jnp.max(jnp.abs(out - ref)))
    # bf16 weights/activations -> loosened tolerance vs the f32 reference
    assert max_err < 5e-2, f"max abs err {max_err}"

    print("KERNEL_OK")
</pallas_src>

<mosaic_0001>
module attributes {stable_mosaic.version = 11 : i64} {
  func.func @disc_kernel(%arg0: i32, %arg1: memref<8x784xf32, #tpu.memory_space<vmem>>, %arg2: memref<8x10xf32, #tpu.memory_space<vmem>>, %arg3: memref<784x256xbf16, #tpu.memory_space<vmem>>, %arg4: memref<10x256xbf16, #tpu.memory_space<vmem>>, %arg5: memref<1x256xf32, #tpu.memory_space<vmem>>, %arg6: memref<256x256xbf16, #tpu.memory_space<vmem>>, %arg7: memref<1x256xf32, #tpu.memory_space<vmem>>, %arg8: memref<1x256xf32, #tpu.memory_space<vmem>>, %arg9: memref<1x1xf32, #tpu.memory_space<smem>>, %arg10: memref<1x1x8xf32, #tpu.memory_space<vmem>>) attributes {dimension_semantics = [#tpu.dimension_semantics<parallel>], iteration_bounds = array<i64: 1>, scalar_prefetch = 0 : i64, scratch_operands = 0 : i64, tpu.core_type = #tpu.core_type<tc>, window_params = [{transform_indices = @transform_0, window_bounds = array<i64: 8, 784>}, {transform_indices = @transform_1, window_bounds = array<i64: 8, 10>}, {pipeline_mode = #tpu.pipeline_mode<synchronous>, transform_indices = @transform_2, window_bounds = array<i64: 784, 256>}, {pipeline_mode = #tpu.pipeline_mode<synchronous>, transform_indices = @transform_3, window_bounds = array<i64: 10, 256>}, {pipeline_mode = #tpu.pipeline_mode<synchronous>, transform_indices = @transform_4, window_bounds = array<i64: 1, 256>}, {pipeline_mode = #tpu.pipeline_mode<synchronous>, transform_indices = @transform_5, window_bounds = array<i64: 256, 256>}, {pipeline_mode = #tpu.pipeline_mode<synchronous>, transform_indices = @transform_6, window_bounds = array<i64: 1, 256>}, {pipeline_mode = #tpu.pipeline_mode<synchronous>, transform_indices = @transform_7, window_bounds = array<i64: 1, 256>}, {transform_indices = @transform_8, window_bounds = array<i64: 1, 1>}, {transform_indices = @transform_9, window_bounds = array<i64: 1, 1, 8>}]} {
    %c0 = arith.constant 0 : index
    %c0_0 = arith.constant 0 : index
    %0 = vector.load %arg1[%c0, %c0_0] : memref<8x784xf32, #tpu.memory_space<vmem>>, vector<8x784xf32>
    %1 = arith.truncf %0 : vector<8x784xf32> to vector<8x784xbf16>
    %c0_1 = arith.constant 0 : index
    %c0_2 = arith.constant 0 : index
    %2 = vector.load %arg2[%c0_1, %c0_2] : memref<8x10xf32, #tpu.memory_space<vmem>>, vector<8x10xf32>
    %3 = arith.truncf %2 : vector<8x10xf32> to vector<8x10xbf16>
    %c0_3 = arith.constant 0 : index
    %c0_4 = arith.constant 0 : index
    %4 = vector.load %arg3[%c0_3, %c0_4] : memref<784x256xbf16, #tpu.memory_space<vmem>>, vector<784x256xbf16>
    %cst = arith.constant dense<0.000000e+00> : vector<8x256xf32>
    %5 = tpu.matmul %1, %4, %cst {dimension_numbers = #tpu.dot_dimension_numbers<[1], [0], [0], [1], [0, 0, 1, 1], [], []>} : vector<8x784xbf16>, vector<784x256xbf16>, vector<8x256xf32> -> vector<8x256xf32>
    %c0_5 = arith.constant 0 : index
    %c0_6 = arith.constant 0 : index
    %6 = vector.load %arg4[%c0_5, %c0_6] : memref<10x256xbf16, #tpu.memory_space<vmem>>, vector<10x256xbf16>
    %cst_7 = arith.constant dense<0.000000e+00> : vector<8x256xf32>
    %7 = tpu.matmul %3, %6, %cst_7 {dimension_numbers = #tpu.dot_dimension_numbers<[1], [0], [0], [1], [0, 0, 1, 1], [], []>} : vector<8x10xbf16>, vector<10x256xbf16>, vector<8x256xf32> -> vector<8x256xf32>
    %8 = arith.addf %5, %7 : vector<8x256xf32>
    %c0_8 = arith.constant 0 : index
    %c0_9 = arith.constant 0 : index
    %9 = vector.load %arg5[%c0_8, %c0_9] : memref<1x256xf32, #tpu.memory_space<vmem>>, vector<1x256xf32>
    %10 = vector.broadcast %9 : vector<1x256xf32> to vector<8x256xf32>
    %11 = arith.addf %8, %10 : vector<8x256xf32>
    %cst_10 = arith.constant 0.000000e+00 : f32
    %12 = vector.broadcast %cst_10 : f32 to vector<8x256xf32>
    %13 = arith.cmpf ogt, %11, %12 : vector<8x256xf32>
    %cst_11 = arith.constant 2.000000e-01 : f32
    %14 = vector.broadcast %cst_11 : f32 to vector<8x256xf32>
    %15 = arith.mulf %14, %11 : vector<8x256xf32>
    %16 = arith.select %13, %11, %15 : vector<8x256xi1>, vector<8x256xf32>
    %17 = arith.truncf %16 : vector<8x256xf32> to vector<8x256xbf16>
    %c0_12 = arith.constant 0 : index
    %c0_13 = arith.constant 0 : index
    %18 = vector.load %arg6[%c0_12, %c0_13] : memref<256x256xbf16, #tpu.memory_space<vmem>>, vector<256x256xbf16>
    %cst_14 = arith.constant dense<0.000000e+00> : vector<8x256xf32>
    %19 = tpu.matmul %17, %18, %cst_14 {dimension_numbers = #tpu.dot_dimension_numbers<[1], [0], [0], [1], [0, 0, 1, 1], [], []>} : vector<8x256xbf16>, vector<256x256xbf16>, vector<8x256xf32> -> vector<8x256xf32>
    %c0_15 = arith.constant 0 : index
    %c0_16 = arith.constant 0 : index
    %20 = vector.load %arg7[%c0_15, %c0_16] : memref<1x256xf32, #tpu.memory_space<vmem>>, vector<1x256xf32>
    %21 = vector.broadcast %20 : vector<1x256xf32> to vector<8x256xf32>
    %22 = arith.addf %19, %21 : vector<8x256xf32>
    %cst_17 = arith.constant 0.000000e+00 : f32
    %23 = vector.broadcast %cst_17 : f32 to vector<8x256xf32>
    %24 = arith.cmpf ogt, %22, %23 : vector<8x256xf32>
    %cst_18 = arith.constant 2.000000e-01 : f32
    %25 = vector.broadcast %cst_18 : f32 to vector<8x256xf32>
    %26 = arith.mulf %25, %22 : vector<8x256xf32>
    %27 = arith.select %24, %22, %26 : vector<8x256xi1>, vector<8x256xf32>
    %c0_19 = arith.constant 0 : index
    %c0_20 = arith.constant 0 : index
    %28 = vector.load %arg8[%c0_19, %c0_20] : memref<1x256xf32, #tpu.memory_space<vmem>>, vector<1x256xf32>
    %29 = vector.broadcast %28 : vector<1x256xf32> to vector<8x256xf32>
    %30 = arith.mulf %27, %29 : vector<8x256xf32>
    %cst_21 = arith.constant dense<0.000000e+00> : vector<8xf32>
    %31 = vector.multi_reduction <add>, %30, %cst_21 [1] : vector<8x256xf32> to vector<8xf32>
    %c0_22 = arith.constant 0 : index
    %c0_23 = arith.constant 0 : index
    %32 = memref.load %arg9[%c0_22, %c0_23] : memref<1x1xf32, #tpu.memory_space<smem>>
    %33 = vector.broadcast %32 : f32 to vector<8xf32>
    %34 = arith.addf %31, %33 : vector<8xf32>
    %35 = vector.shape_cast %34 : vector<8xf32> to vector<1x1x8xf32>
    %c0_24 = arith.constant 0 : index
    %c0_25 = arith.constant 0 : index
    %c0_26 = arith.constant 0 : index
    %36 = vector.load %arg10[%c0_24, %c0_25, %c0_26] : memref<1x1x8xf32, #tpu.memory_space<vmem>>, vector<1x1x8xf32>
    tpu.vector_store %arg10[%c0_24, %c0_25, %c0_26], %35 {strides = array<i32>} : memref<1x1x8xf32, #tpu.memory_space<vmem>>, vector<1x1x8xf32>,
    return
  }
  func.func @transform_0(%arg0: i32) -> (i32, i32) {
    %c0_i32 = arith.constant 0 : i32
    %c0_i32_0 = arith.constant 0 : i32
    return %arg0, %c0_i32 : i32, i32
  }
  func.func @transform_1(%arg0: i32) -> (i32, i32) {
    %c0_i32 = arith.constant 0 : i32
    %c0_i32_0 = arith.constant 0 : i32
    return %arg0, %c0_i32 : i32, i32
  }
  func.func @transform_2(%arg0: i32) -> (i32, i32) {
    %c0_i32 = arith.constant 0 : i32
    %c0_i32_0 = arith.constant 0 : i32
    %c0_i32_1 = arith.constant 0 : i32
    return %c0_i32, %c0_i32_0 : i32, i32
  }
  func.func @transform_3(%arg0: i32) -> (i32, i32) {
    %c0_i32 = arith.constant 0 : i32
    %c0_i32_0 = arith.constant 0 : i32
    %c0_i32_1 = arith.constant 0 : i32
    return %c0_i32, %c0_i32_0 : i32, i32
  }
  func.func @transform_4(%arg0: i32) -> (i32, i32) {
    %c0_i32 = arith.constant 0 : i32
    %c0_i32_0 = arith.constant 0 : i32
    %c0_i32_1 = arith.constant 0 : i32
    return %c0_i32, %c0_i32_0 : i32, i32
  }
  func.func @transform_5(%arg0: i32) -> (i32, i32) {
    %c0_i32 = arith.constant 0 : i32
    %c0_i32_0 = arith.constant 0 : i32
    %c0_i32_1 = arith.constant 0 : i32
    return %c0_i32, %c0_i32_0 : i32, i32
  }
  func.func @transform_6(%arg0: i32) -> (i32, i32) {
    %c0_i32 = arith.constant 0 : i32
    %c0_i32_0 = arith.constant 0 : i32
    %c0_i32_1 = arith.constant 0 : i32
    return %c0_i32, %c0_i32_0 : i32, i32
  }
  func.func @transform_7(%arg0: i32) -> (i32, i32) {
    %c0_i32 = arith.constant 0 : i32
    %c0_i32_0 = arith.constant 0 : i32
    %c0_i32_1 = arith.constant 0 : i32
    return %c0_i32, %c0_i32_0 : i32, i32
  }
  func.func @transform_8(%arg0: i32) -> (i32, i32) {
    %c0_i32 = arith.constant 0 : i32
    %c0_i32_0 = arith.constant 0 : i32
    %c0_i32_1 = arith.constant 0 : i32
    return %c0_i32, %c0_i32_0 : i32, i32
  }
  func.func @transform_9(%arg0: i32) -> (i32, i32, i32) {
    %c0_i32 = arith.constant 0 : i32
    %c0_i32_0 = arith.constant 0 : i32
    %c0_i32_1 = arith.constant 0 : i32
    return %arg0, %c0_i32, %c0_i32_0 : i32, i32, i32
  }
}

</mosaic_0001>

<llo_original>
// kernel: tpu_custom_call.1
$region0: #{tpu_custom_call.1}
  #allocation0 [shape = 'u32[]', space=smem, size = 0x4, offset = 0x4, fixed_abs, tag = 'smem constant byte address 0x4 - core index']
  #allocation1 [shape = 'u32[144,128]{1,0:T(1,128)}', space=vmem, size = 0x12000, scoped, tag = 'internal scratch']
  #allocation2 [shape = 'f32[1,1]{1,0:T(1,128)S(6)}', space=smem, size = 0x200, scoped, tag = 'scoped memory for tpu_custom_call.1']
  %s0 = inlined_call_operand.hbm [shape: f32[8,784], index: 0, kind: input, shape index: {}]
  %s1 = inlined_call_operand.hbm [shape: f32[8,10], index: 1, kind: input, shape index: {}]
  %s2 = inlined_call_operand.hbm [shape: bf16[784,256], index: 2, kind: input, shape index: {}]
  %s3 = inlined_call_operand.hbm [shape: bf16[10,256], index: 3, kind: input, shape index: {}]
  %s4 = inlined_call_operand.vmem [shape: f32[1,256], index: 4, kind: input, shape index: {}]
  %s5 = inlined_call_operand.hbm [shape: bf16[256,256], index: 5, kind: input, shape index: {}]
  %s6 = inlined_call_operand.vmem [shape: f32[1,256], index: 6, kind: input, shape index: {}]
  %s7 = inlined_call_operand.vmem [shape: f32[1,256], index: 7, kind: input, shape index: {}]
  %s8 = inlined_call_operand.<no memory space> [shape: f32[1,1], index: 8, kind: input, shape index: {}]
  %s9 = inlined_call_operand.hbm [shape: f32[1,1,8], index: 9, kind: output, shape index: {}]
  %s10 = sld [smem:[#allocation0]]
  $region66: #{tpu_custom_call.1} parent=0
    _
  %s12 = ssub.s32 1, %s10
  %s13 = scalar_select 0, %s12, %s10
  %14 = sst [smem:[#allocation2]] %s8
  $region1: #{tpu_custom_call.1} parent=0
    #allocation3 [shape = 'u8[28672]{0}', space=vmem, size = 0x7000, scoped, tag = 'input window, operand 0, single buffered']
    #allocation4 [shape = 's32[1]{0}', space=sflag, size = 0x4, scoped, tag = 'scoped memory for tpu_custom_call.1']
    #allocation5 [shape = 's32[1]{0}', space=sflag, size = 0x4, scoped, tag = 'scoped memory for tpu_custom_call.1']
    #allocation6 [shape = 'u8[4096]{0}', space=vmem, size = 0x1000, scoped, tag = 'input window, operand 1, single buffered']
    #allocation7 [shape = 's32[1]{0}', space=sflag, size = 0x4, scoped, tag = 'scoped memory for tpu_custom_call.1']
    #allocation8 [shape = 'u8[401408]{0}', space=vmem, size = 0x62000, scoped, tag = 'input window, operand 2, single buffered']
    #allocation9 [shape = 'u8[8192]{0}', space=vmem, size = 0x2000, scoped, tag = 'input window, operand 3, single buffered']
    #allocation10 [shape = 's32[1]{0}', space=sflag, size = 0x4, scoped, tag = 'scoped memory for tpu_custom_call.1']
    #allocation11 [shape = 'u8[131072]{0}', space=vmem, size = 0x20000, scoped, tag = 'input window, operand 5, single buffered']
    #allocation12 [shape = 'u8[512]{0}', space=vmem, size = 0x400, scoped, tag = 'output window, operand 0, single buffered']
    %15 = vsyncpa [#allocation4], 0
    %16 = vsyncpa [#allocation7], 0
    %17 = vsyncpa [#allocation10], 0
    %18 = vsyncpa [#allocation5], 0
    // Predicated region
    $region2: #{tpu_custom_call.1} parent=1 // pred_check
      _
    $region3: #{tpu_custom_call.1} parent=1 // pred_check_branch
      %20 = sbr.rel (0) target = $region5
    $region4: #{tpu_custom_call.1} parent=1 // pred_region
      %s22 = ssub.s32 896, 896
      %23 = vsyncadd [#allocation4], %s22
      %s25 = sshll.u32 [#allocation3], 4
      %s26 = int_to_ptr.vmem [resolvable:$true] %s25
      %28 = dma.hbm_to_vmem [thread:$0]  %s0, 896, %s26, [#allocation4]
    $region5: #{tpu_custom_call.1} parent=1 // pred_fallthru
      _
    // Predicated region
    $region6: #{tpu_custom_call.1} parent=1 // pred_check
      _
    $region7: #{tpu_custom_call.1} parent=1 // pred_check_branch
      %30 = sbr.rel (0) target = $region9
    $region8: #{tpu_custom_call.1} parent=1 // pred_region
      %s32 = ssub.s32 128, 128
      %33 = vsyncadd [#allocation7], %s32
      %s35 = sshll.u32 [#allocation6], 4
      %s36 = int_to_ptr.vmem [resolvable:$true] %s35
      %38 = dma.hbm_to_vmem [thread:$0]  %s1, 128, %s36, [#allocation7]
    $region9: #{tpu_custom_call.1} parent=1 // pred_fallthru
      _
    // Predicated region
    $region10: #{tpu_custom_call.1} parent=1 // pred_check
      _
    $region11: #{tpu_custom_call.1} parent=1 // pred_check_branch
      %40 = sbr.rel (0) target = $region13
    $region12: #{tpu_custom_call.1} parent=1 // pred_region
      %s42 = ssub.s32 12544, 12544
      %43 = vsyncadd [#allocation7], %s42
      %s44 = sshll.u32 [#allocation8], 4
      %s45 = int_to_ptr.vmem [resolvable:$true] %s44
      %50 = dma.hbm_to_vmem [thread:$0]  %s2, 12544, %s45, [#allocation7], 128, 128, 8
    $region13: #{tpu_custom_call.1} parent=1 // pred_fallthru
      _
    // Predicated region
    $region14: #{tpu_custom_call.1} parent=1 // pred_check
      _
    $region15: #{tpu_custom_call.1} parent=1 // pred_check_branch
      %52 = sbr.rel (0) target = $region17
    $region16: #{tpu_custom_call.1} parent=1 // pred_region
      %s54 = ssub.s32 256, 256
      %55 = vsyncadd [#allocation10], %s54
      %s56 = sshll.u32 [#allocation9], 4
      %s57 = int_to_ptr.vmem [resolvable:$true] %s56
      %62 = dma.hbm_to_vmem [thread:$0]  %s3, 256, %s57, [#allocation10], 128, 128, 8
    $region17: #{tpu_custom_call.1} parent=1 // pred_fallthru
      _
    // Predicated region
    $region18: #{tpu_custom_call.1} parent=1 // pred_check
      _
    $region19: #{tpu_custom_call.1} parent=1 // pred_check_branch
      %64 = sbr.rel (0) target = $region21
    $region20: #{tpu_custom_call.1} parent=1 // pred_region
      _
    $region21: #{tpu_custom_call.1} parent=1 // pred_fallthru
      _
    // Predicated region
    $region22: #{tpu_custom_call.1} parent=1 // pred_check
      _
    $region23: #{tpu_custom_call.1} parent=1 // pred_check_branch
      %66 = sbr.rel (0) target = $region25
    $region24: #{tpu_custom_call.1} parent=1 // pred_region
      %s68 = ssub.s32 4096, 4096
      %69 = vsyncadd [#allocation10], %s68
      %s70 = sshll.u32 [#allocation11], 4
      %s71 = int_to_ptr.vmem [resolvable:$true] %s70
      %76 = dma.hbm_to_vmem [thread:$0]  %s5, 4096, %s71, [#allocation10], 128, 128, 8
    $region25: #{tpu_custom_call.1} parent=1 // pred_fallthru
      _
    // Predicated region
    $region26: #{tpu_custom_call.1} parent=1 // pred_check
      _
    $region27: #{tpu_custom_call.1} parent=1 // pred_check_branch
      %78 = sbr.rel (0) target = $region29
    $region28: #{tpu_custom_call.1} parent=1 // pred_region
      _
    $region29: #{tpu_custom_call.1} parent=1 // pred_fallthru
      _
    // Predicated region
    $region30: #{tpu_custom_call.1} parent=1 // pred_check
      _
    $region31: #{tpu_custom_call.1} parent=1 // pred_check_branch
      %80 = sbr.rel (0) target = $region33
    $region32: #{tpu_custom_call.1} parent=1 // pred_region
      _
    $region33: #{tpu_custom_call.1} parent=1 // pred_fallthru
      _
    // Predicated region
    $region34: #{tpu_custom_call.1} parent=1 // pred_check
      _
    $region35: #{tpu_custom_call.1} parent=1 // pred_check_branch
      %82 = sbr.rel (0) target = $region37
    $region36: #{tpu_custom_call.1} parent=1 // pred_region
      _
    $region37: #{tpu_custom_call.1} parent=1 // pred_fallthru
      _
    // Predicated region
    $region38: #{tpu_custom_call.1} parent=1 // pred_check
      _
    $region39: #{tpu_custom_call.1} parent=1 // pred_check_branch
      %84 = sbr.rel (0) target = $region41
    $region40: #{tpu_custom_call.1} parent=1 // pred_region
      %85 = dma.done [#allocation4], 896
    $region41: #{tpu_custom_call.1} parent=1 // pred_fallthru
      _
    // Predicated region
    $region42: #{tpu_custom_call.1} parent=1 // pred_check
      _
    $region43: #{tpu_custom_call.1} parent=1 // pred_check_branch
      %87 = sbr.rel (0) target = $region45
    $region44: #{tpu_custom_call.1} parent=1 // pred_region
      %88 = dma.done [#allocation7], 128
    $region45: #{tpu_custom_call.1} parent=1 // pred_fallthru
      _
    // Predicated region
    $region46: #{tpu_custom_call.1} parent=1 // pred_check
      _
    $region47: #{tpu_custom_call.1} parent=1 // pred_check_branch
      %90 = sbr.rel (0) target = $region49
    $region48: #{tpu_custom_call.1} parent=1 // pred_region
      %91 = dma.done [#allocation7], 12544
    $region49: #{tpu_custom_call.1} parent=1 // pred_fallthru
      _
    // Predicated region
    $region50: #{tpu_custom_call.1} parent=1 // pred_check
      _
    $region51: #{tpu_custom_call.1} parent=1 // pred_check_branch
      %93 = sbr.rel (0) target = $region53
    $region52: #{tpu_custom_call.1} parent=1 // pred_region
      %94 = dma.done [#allocation10], 256
    $region53: #{tpu_custom_call.1} parent=1 // pred_fallthru
      _
    // Predicated region
    $region54: #{tpu_custom_call.1} parent=1 // pred_check
      _
    $region55: #{tpu_custom_call.1} parent=1 // pred_check_branch
      %96 = sbr.rel (0) target = $region57
    $region56: #{tpu_custom_call.1} parent=1 // pred_region
      %97 = dma.done [#allocation10], 4096
    $region57: #{tpu_custom_call.1} parent=1 // pred_fallthru
      _
    %v99 = vld [vmem:[#allocation3] sm:$0xff]
    %v100 = vld [vmem:[#allocation3 + $0x8] sm:$0xff]
    %v101 = vld [vmem:[#allocation3 + $0x10] sm:$0xff]
    %v102 = vld [vmem:[#allocation3 + $0x18] sm:$0xff]
    %v103 = vld [vmem:[#allocation3 + $0x20] sm:$0xff]
    %v104 = vld [vmem:[#allocation3 + $0x28] sm:$0xff]
    %v105 = vld [vmem:[#allocation3 + $0x30] sm:$0xff]
    %v106 = vpack.c.bf16 %v99, %v99
    %v107 = vpack.c.bf16 %v100, %v100
    %v108 = vpack.c.bf16 %v101, %v101
    %v109 = vpack.c.bf16 %v102, %v102
    %v110 = vpack.c.bf16 %v103, %v103
    %v111 = vpack.c.bf16 %v104, %v104
    %v112 = vpack.c.bf16 %v105, %v105
    %v113 = vld [vmem:[#allocation6] sm:$0xff]
    %v114 = vpack.c.bf16 %v113, %v113
    %v115 = vld [vmem:[#allocation8] sm:$0xff]
    %v116 = vld [vmem:[#allocation8 + $0x8] sm:$0xff]
    %v117 = vld [vmem:[#allocation8 + $0x10] sm:$0xff]
    %v118 = vld [vmem:[#allocation8 + $0x18] sm:$0xff]
    %v119 = vld [vmem:[#allocation8 + $0x20] sm:$0xff]
    %v120 = vld [vmem:[#allocation8 + $0x28] sm:$0xff]
    %v121 = vld [vmem:[#allocation8 + $0x30] sm:$0xff]
    %v122 = vld [vmem:[#allocation8 + $0x38] sm:$0xff]
    %v123 = vld [vmem:[#allocation8 + $0x40] sm:$0xff]
    %v124 = vld [vmem:[#allocation8 + $0x48] sm:$0xff]
    %v125 = vld [vmem:[#allocation8 + $0x50] sm:$0xff]
    %v126 = vld [vmem:[#allocation8 + $0x58] sm:$0xff]
    %v127 = vld [vmem:[#allocation8 + $0x60] sm:$0xff]
    %v128 = vld [vmem:[#allocation8 + $0x68] sm:$0xff]
    %v129 = vld [vmem:[#allocation8 + $0x70] sm:$0xff]
    %v130 = vld [vmem:[#allocation8 + $0x78] sm:$0xff]
    %v131 = vld [vmem:[#allocation8 + $0x80] sm:$0xff]
    %v132 = vld [vmem:[#allocation8 + $0x88] sm:$0xff]
    %v133 = vld [vmem:[#allocation8 + $0x90] sm:$0xff]
    %v134 = vld [vmem:[#allocation8 + $0x98] sm:$0xff]
    %v135 = vld [vmem:[#allocation8 + $0xa0] sm:$0xff]
    %v136 = vld [vmem:[#allocation8 + $0xa8] sm:$0xff]
    %v137 = vld [vmem:[#allocation8 + $0xb0] sm:$0xff]
    %v138 = vld [vmem:[#allocation8 + $0xb8] sm:$0xff]
    %v139 = vld [vmem:[#allocation8 + $0xc0] sm:$0xff]
    %v140 = vld [vmem:[#allocation8 + $0xc8] sm:$0xff]
    %v141 = vld [vmem:[#allocation8 + $0xd0] sm:$0xff]
    %v142 = vld [vmem:[#allocation8 + $0xd8] sm:$0xff]
    %v143 = vld [vmem:[#allocation8 + $0xe0] sm:$0xff]
    %v144 = vld [vmem:[#allocation8 + $0xe8] sm:$0xff]
    %v145 = vld [vmem:[#allocation8 + $0xf0] sm:$0xff]
    %v146 = vld [vmem:[#allocation8 + $0xf8] sm:$0xff]
    %v147 = vld [vmem:[#allocation8 + $0x100] sm:$0xff]
    %v148 = vld [vmem:[#allocation8 + $0x108] sm:$0xff]
    %v149 = vld [vmem:[#allocation8 + $0x110] sm:$0xff]
    %v150 = vld [vmem:[#allocation8 + $0x118] sm:$0xff]
    %v151 = vld [vmem:[#allocation8 + $0x120] sm:$0xff]
    %v152 = vld [vmem:[#allocation8 + $0x128] sm:$0xff]
    %v153 = vld [vmem:[#allocation8 + $0x130] sm:$0xff]
    %v154 = vld [vmem:[#allocation8 + $0x138] sm:$0xff]
    %v155 = vld [vmem:[#allocation8 + $0x140] sm:$0xff]
    %v156 = vld [vmem:[#allocation8 + $0x148] sm:$0xff]
    %v157 = vld [vmem:[#allocation8 + $0x150] sm:$0xff]
    %v158 = vld [vmem:[#allocation8 + $0x158] sm:$0xff]
    %v159 = vld [vmem:[#allocation8 + $0x160] sm:$0xff]
    %v160 = vld [vmem:[#allocation8 + $0x168] sm:$0xff]
    %v161 = vld [vmem:[#allocation8 + $0x170] sm:$0xff]
    %v162 = vld [vmem:[#allocation8 + $0x178] sm:$0xff]
    %v163 = vld [vmem:[#allocation8 + $0x180] sm:$0xff]
    %v164 = vld [vmem:[#allocation8 + $0x188] sm:$0xff]
    %v165 = vld [vmem:[#allocation8 + $0x190] sm:$0xff]
    %v166 = vld [vmem:[#allocation8 + $0x198] sm:$0xff]
    %v167 = vld [vmem:[#allocation8 + $0x1a0] sm:$0xff]
    %v168 = vld [vmem:[#allocation8 + $0x1a8] sm:$0xff]
    %v169 = vld [vmem:[#allocation8 + $0x1b0] sm:$0xff]
    %v170 = vld [vmem:[#allocation8 + $0x1b8] sm:$0xff]
    %v171 = vld [vmem:[#allocation8 + $0x1c0] sm:$0xff]
    %v172 = vld [vmem:[#allocation8 + $0x1c8] sm:$0xff]
    %v173 = vld [vmem:[#allocation8 + $0x1d0] sm:$0xff]
    %v174 = vld [vmem:[#allocation8 + $0x1d8] sm:$0xff]
    %v175 = vld [vmem:[#allocation8 + $0x1e0] sm:$0xff]
    %v176 = vld [vmem:[#allocation8 + $0x1e8] sm:$0xff]
    %v177 = vld [vmem:[#allocation8 + $0x1f0] sm:$0xff]
    %v178 = vld [vmem:[#allocation8 + $0x1f8] sm:$0xff]
    %v179 = vld [vmem:[#allocation8 + $0x200] sm:$0xff]
    %v180 = vld [vmem:[#allocation8 + $0x208] sm:$0xff]
    %v181 = vld [vmem:[#allocation8 + $0x210] sm:$0xff]
    %v182 = vld [vmem:[#allocation8 + $0x218] sm:$0xff]
    %v183 = vld [vmem:[#allocation8 + $0x220] sm:$0xff]
    %v184 = vld [vmem:[#allocation8 + $0x228] sm:$0xff]
    %v185 = vld [vmem:[#allocation8 + $0x230] sm:$0xff]
    %v186 = vld [vmem:[#allocation8 + $0x238] sm:$0xff]
    %v187 = vld [vmem:[#allocation8 + $0x240] sm:$0xff]
    %v188 = vld [vmem:[#allocation8 + $0x248] sm:$0xff]
    %v189 = vld [vmem:[#allocation8 + $0x250] sm:$0xff]
    %v190 = vld [vmem:[#allocation8 + $0x258] sm:$0xff]
    %v191 = vld [vmem:[#allocation8 + $0x260] sm:$0xff]
    %v192 = vld [vmem:[#allocation8 + $0x268] sm:$0xff]
    %v193 = vld [vmem:[#allocation8 + $0x270] sm:$0xff]
    %v194 = vld [vmem:[#allocation8 + $0x278] sm:$0xff]
    %v195 = vld [vmem:[#allocation8 + $0x280] sm:$0xff]
    %v196 = vld [vmem:[#allocation8 + $0x288] sm:$0xff]
    %v197 = vld [vmem:[#allocation8 + $0x290] sm:$0xff]
    %v198 = vld [vmem:[#allocation8 + $0x298] sm:$0xff]
    %v199 = vld [vmem:[#allocation8 + $0x2a0] sm:$0xff]
    %v200 = vld [vmem:[#allocation8 + $0x2a8] sm:$0xff]
    %v201 = vld [vmem:[#allocation8 + $0x2b0] sm:$0xff]
    %v202 = vld [vmem:[#allocation8 + $0x2b8] sm:$0xff]
    %v203 = vld [vmem:[#allocation8 + $0x2c0] sm:$0xff]
    %v204 = vld [vmem:[#allocation8 + $0x2c8] sm:$0xff]
    %v205 = vld [vmem:[#allocation8 + $0x2d0] sm:$0xff]
    %v206 = vld [vmem:[#allocation8 + $0x2d8] sm:$0xff]
    %v207 = vld [vmem:[#allocation8 + $0x2e0] sm:$0xff]
    %v208 = vld [vmem:[#allocation8 + $0x2e8] sm:$0xff]
    %v209 = vld [vmem:[#allocation8 + $0x2f0] sm:$0xff]
    %v210 = vld [vmem:[#allocation8 + $0x2f8] sm:$0xff]
    %v211 = vld [vmem:[#allocation8 + $0x300] sm:$0xff]
    %v212 = vld [vmem:[#allocation8 + $0x308] sm:$0xff]
    %v213 = vld [vmem:[#allocation9] sm:$0xff]
    %v214 = vld [vmem:[#allocation9 + $0x8] sm:$0x11]
    %v217 = vunpack.c.l.b16 %v213
    %v218 = vunpack.c.h.b16 %v213
    %v219 = vunpack.c.l.b16 %v214
    %v220 = vunpack.c.h.b16 %v214
    %v221 = vpack.c.b16 %v219, %v217
    %v222 = vpack.c.b16 %v220, %v218
    %vm223 = vcmask 80896
    %v225 = vsel %vm223, %v114, 0
    %vm227 = vcmask 1044480
    %v229 = vsel %vm227, %v221, 0
    %v232 = vsel %vm227, %v222, 0
    %234 = vmatprep.subr.bf16.mxu0 0
    %235 = vmatpush1.bf16.msra.mxu0 0
    %236 = vmatprep.subr.bf16.mxu0 0
    %237 = vmatpush1.bf16.msra.mxu0 0
    %238 = vmatprep.subr.bf16.mxu0 0
    %239 = vmatpush1.bf16.msra.mxu0 0
    %240 = vmatprep.subr.bf16.mxu0 0
    %241 = vmatpush1.bf16.msra.mxu0 0
    %242 = vmatprep.subr.bf16.mxu0 0
    %243 = vmatpush1.bf16.msra.mxu0 0
    %244 = vmatprep.subr.bf16.mxu0 0
    %245 = vmatpush1.bf16.msra.mxu0 0
    %246 = vmatprep.subr.bf16.mxu0 0
    %247 = vmatpush1.bf16.msra.mxu0 0
    %248 = vmatprep.subr.bf16.mxu0 %v232
    %249 = vmatpush1.bf16.msra.mxu0 %v229
    %250 = vmatprep.subr.bf16.mxu0 0
    %251 = vmatpush2.bf16.msra.mxu0 0
    %252 = vmatprep.subr.bf16.mxu0 0
    %253 = vmatpush2.bf16.msra.mxu0 0
    %254 = vmatprep.subr.bf16.mxu0 0
    %255 = vmatpush2.bf16.msra.mxu0 0
    %256 = vmatprep.subr.bf16.mxu0 0
    %257 = vmatpush2.bf16.msra.mxu0 0
    %258 = vmatprep.subr.bf16.mxu0 0
    %259 = vmatpush2.bf16.msra.mxu0 0
    %260 = vmatprep.subr.bf16.mxu0 0
    %261 = vmatpush2.bf16.msra.mxu0 0
    %262 = vmatprep.subr.bf16.mxu0 0
    %263 = vmatpush2.bf16.msra.mxu0 0
    %264 = vmatprep.subr.bf16.mxu0 0
    %265 = vmatpush2.bf16.msra.mxu0 0
    %266 = vmatprep.mubr.bf16.mxu0 0
    %267 = vmatmul.mubr.bf16.gmra.mxu0 %v225
    %v268 = vpop.f32.mrf.mxu0
    %v269 = vadd.f32 0.0, %v268
    %v270 = vpop.f32.mrf.mxu0
    %v271 = vadd.f32 0.0, %v270
    %v272 = vpop.f32.mrf.mxu0
    %v273 = vpop.f32.mrf.mxu0
    %274 = vdwg.mxu0
    %v373 = vunpack.c.l.b16 %v115
    %v374 = vunpack.c.h.b16 %v115
    %v375 = vunpack.c.l.b16 %v116
    %v376 = vunpack.c.h.b16 %v116
    %v377 = vunpack.c.l.b16 %v117
    %v378 = vunpack.c.h.b16 %v117
    %v379 = vunpack.c.l.b16 %v118
    %v380 = vunpack.c.h.b16 %v118
    %v381 = vunpack.c.l.b16 %v119
    %v382 = vunpack.c.h.b16 %v119
    %v383 = vunpack.c.l.b16 %v120
    %v384 = vunpack.c.h.b16 %v120
    %v385 = vunpack.c.l.b16 %v121
    %v386 = vunpack.c.h.b16 %v121
    %v387 = vunpack.c.l.b16 %v122
    %v388 = vunpack.c.h.b16 %v122
    %v389 = vunpack.c.l.b16 %v123
    %v390 = vunpack.c.h.b16 %v123
    %v391 = vunpack.c.l.b16 %v124
    %v392 = vunpack.c.h.b16 %v124
    %v393 = vunpack.c.l.b16 %v125
    %v394 = vunpack.c.h.b16 %v125
    %v395 = vunpack.c.l.b16 %v126
    %v396 = vunpack.c.h.b16 %v126
    %v397 = vunpack.c.l.b16 %v127
    %v398 = vunpack.c.h.b16 %v127
    %v399 = vunpack.c.l.b16 %v128
    %v400 = vunpack.c.h.b16 %v128
    %v401 = vunpack.c.l.b16 %v129
    %v402 = vunpack.c.h.b16 %v129
    %v403 = vunpack.c.l.b16 %v130
    %v404 = vunpack.c.h.b16 %v130
    %v405 = vunpack.c.l.b16 %v131
    %v406 = vunpack.c.h.b16 %v131
    %v407 = vunpack.c.l.b16 %v132
    %v408 = vunpack.c.h.b16 %v132
    %v409 = vunpack.c.l.b16 %v133
    %v410 = vunpack.c.h.b16 %v133
    %v411 = vunpack.c.l.b16 %v134
    %v412 = vunpack.c.h.b16 %v134
    %v413 = vunpack.c.l.b16 %v135
    %v414 = vunpack.c.h.b16 %v135
    %v415 = vunpack.c.l.b16 %v136
    %v416 = vunpack.c.h.b16 %v136
    %v417 = vunpack.c.l.b16 %v137
    %v418 = vunpack.c.h.b16 %v137
    %v419 = vunpack.c.l.b16 %v138
    %v420 = vunpack.c.h.b16 %v138
    %v421 = vunpack.c.l.b16 %v139
    %v422 = vunpack.c.h.b16 %v139
    %v423 = vunpack.c.l.b16 %v140
    %v424 = vunpack.c.h.b16 %v140
    %v425 = vunpack.c.l.b16 %v141
    %v426 = vunpack.c.h.b16 %v141
    %v427 = vunpack.c.l.b16 %v142
    %v428 = vunpack.c.h.b16 %v142
    %v429 = vunpack.c.l.b16 %v143
    %v430 = vunpack.c.h.b16 %v143
    %v431 = vunpack.c.l.b16 %v144
    %v432 = vunpack.c.h.b16 %v144
    %v433 = vunpack.c.l.b16 %v145
    %v434 = vunpack.c.h.b16 %v145
    %v435 = vunpack.c.l.b16 %v146
    %v436 = vunpack.c.h.b16 %v146
    %v437 = vunpack.c.l.b16 %v147
    %v438 = vunpack.c.h.b16 %v147
    %v439 = vunpack.c.l.b16 %v148
    %v440 = vunpack.c.h.b16 %v148
    %v441 = vunpack.c.l.b16 %v149
    %v442 = vunpack.c.h.b16 %v149
    %v443 = vunpack.c.l.b16 %v150
    %v444 = vunpack.c.h.b16 %v150
    %v445 = vunpack.c.l.b16 %v151
    %v446 = vunpack.c.h.b16 %v151
    %v447 = vunpack.c.l.b16 %v152
    %v448 = vunpack.c.h.b16 %v152
    %v449 = vunpack.c.l.b16 %v153
    %v450 = vunpack.c.h.b16 %v153
    %v451 = vunpack.c.l.b16 %v154
    %v452 = vunpack.c.h.b16 %v154
    %v453 = vunpack.c.l.b16 %v155
    %v454 = vunpack.c.h.b16 %v155
    %v455 = vunpack.c.l.b16 %v156
    %v456 = vunpack.c.h.b16 %v156
    %v457 = vunpack.c.l.b16 %v157
    %v458 = vunpack.c.h.b16 %v157
    %v459 = vunpack.c.l.b16 %v158
    %v460 = vunpack.c.h.b16 %v158
    %v461 = vunpack.c.l.b16 %v159
    %v462 = vunpack.c.h.b16 %v159
    %v463 = vunpack.c.l.b16 %v160
    %v464 = vunpack.c.h.b16 %v160
    %v465 = vunpack.c.l.b16 %v161
    %v466 = vunpack.c.h.b16 %v161
    %v467 = vunpack.c.l.b16 %v162
    %v468 = vunpack.c.h.b16 %v162
    %v469 = vunpack.c.l.b16 %v163
    %v470 = vunpack.c.h.b16 %v163
    %v471 = vunpack.c.l.b16 %v164
    %v472 = vunpack.c.h.b16 %v164
    %v473 = vunpack.c.l.b16 %v165
    %v474 = vunpack.c.h.b16 %v165
    %v475 = vunpack.c.l.b16 %v166
    %v476 = vunpack.c.h.b16 %v166
    %v477 = vunpack.c.l.b16 %v167
    %v478 = vunpack.c.h.b16 %v167
    %v479 = vunpack.c.l.b16 %v168
    %v480 = vunpack.c.h.b16 %v168
    %v481 = vunpack.c.l.b16 %v169
    %v482 = vunpack.c.h.b16 %v169
    %v483 = vunpack.c.l.b16 %v170
    %v484 = vunpack.c.h.b16 %v170
    %v485 = vunpack.c.l.b16 %v171
    %v486 = vunpack.c.h.b16 %v171
    %v487 = vunpack.c.l.b16 %v172
    %v488 = vunpack.c.h.b16 %v172
    %v489 = vunpack.c.l.b16 %v173
    %v490 = vunpack.c.h.b16 %v173
    %v491 = vunpack.c.l.b16 %v174
    %v492 = vunpack.c.h.b16 %v174
    %v493 = vunpack.c.l.b16 %v175
    %v494 = vunpack.c.h.b16 %v175
    %v495 = vunpack.c.l.b16 %v176
    %v496 = vunpack.c.h.b16 %v176
    %v497 = vunpack.c.l.b16 %v177
    %v498 = vunpack.c.h.b16 %v177
    %v499 = vunpack.c.l.b16 %v178
    %v500 = vunpack.c.h.b16 %v178
    %v501 = vunpack.c.l.b16 %v179
    %v502 = vunpack.c.h.b16 %v179
    %v503 = vunpack.c.l.b16 %v180
    %v504 = vunpack.c.h.b16 %v180
    %v505 = vunpack.c.l.b16 %v181
    %v506 = vunpack.c.h.b16 %v181
    %v507 = vunpack.c.l.b16 %v182
    %v508 = vunpack.c.h.b16 %v182
    %v509 = vunpack.c.l.b16 %v183
    %v510 = vunpack.c.h.b16 %v183
    %v511 = vunpack.c.l.b16 %v184
    %v512 = vunpack.c.h.b16 %v184
    %v513 = vunpack.c.l.b16 %v185
    %v514 = vunpack.c.h.b16 %v185
    %v515 = vunpack.c.l.b16 %v186
    %v516 = vunpack.c.h.b16 %v186
    %v517 = vunpack.c.l.b16 %v187
    %v518 = vunpack.c.h.b16 %v187
    %v519 = vunpack.c.l.b16 %v188
    %v520 = vunpack.c.h.b16 %v188
    %v521 = vunpack.c.l.b16 %v189
    %v522 = vunpack.c.h.b16 %v189
    %v523 = vunpack.c.l.b16 %v190
    %v524 = vunpack.c.h.b16 %v190
    %v525 = vunpack.c.l.b16 %v191
    %v526 = vunpack.c.h.b16 %v191
    %v527 = vunpack.c.l.b16 %v192
    %v528 = vunpack.c.h.b16 %v192
    %v529 = vunpack.c.l.b16 %v193
    %v530 = vunpack.c.h.b16 %v193
    %v531 = vunpack.c.l.b16 %v194
    %v532 = vunpack.c.h.b16 %v194
    %v533 = vunpack.c.l.b16 %v195
    %v534 = vunpack.c.h.b16 %v195
    %v535 = vunpack.c.l.b16 %v196
    %v536 = vunpack.c.h.b16 %v196
    %v537 = vunpack.c.l.b16 %v197
    %v538 = vunpack.c.h.b16 %v197
    %v539 = vunpack.c.l.b16 %v198
    %v540 = vunpack.c.h.b16 %v198
    %v541 = vunpack.c.l.b16 %v199
    %v542 = vunpack.c.h.b16 %v199
    %v543 = vunpack.c.l.b16 %v200
    %v544 = vunpack.c.h.b16 %v200
    %v545 = vunpack.c.l.b16 %v201
    %v546 = vunpack.c.h.b16 %v201
    %v547 = vunpack.c.l.b16 %v202
    %v548 = vunpack.c.h.b16 %v202
    %v549 = vunpack.c.l.b16 %v203
    %v550 = vunpack.c.h.b16 %v203
    %v551 = vunpack.c.l.b16 %v204
    %v552 = vunpack.c.h.b16 %v204
    %v553 = vunpack.c.l.b16 %v205
    %v554 = vunpack.c.h.b16 %v205
    %v555 = vunpack.c.l.b16 %v206
    %v556 = vunpack.c.h.b16 %v206
    %v557 = vunpack.c.l.b16 %v207
    %v558 = vunpack.c.h.b16 %v207
    %v559 = vunpack.c.l.b16 %v208
    %v560 = vunpack.c.h.b16 %v208
    %v561 = vunpack.c.l.b16 %v209
    %v562 = vunpack.c.h.b16 %v209
    %v563 = vunpack.c.l.b16 %v210
    %v564 = vunpack.c.h.b16 %v210
    %v565 = vunpack.c.l.b16 %v211
    %v566 = vunpack.c.h.b16 %v211
    %v567 = vunpack.c.l.b16 %v212
    %v568 = vunpack.c.h.b16 %v212
    %v569 = vpack.c.b16 %v375, %v373
    %v570 = vpack.c.b16 %v376, %v374
    %v571 = vpack.c.b16 %v379, %v377
    %v572 = vpack.c.b16 %v380, %v378
    %v573 = vpack.c.b16 %v383, %v381
    %v574 = vpack.c.b16 %v384, %v382
    %v575 = vpack.c.b16 %v387, %v385
    %v576 = vpack.c.b16 %v388, %v386
    %v577 = vpack.c.b16 %v391, %v389
    %v578 = vpack.c.b16 %v392, %v390
    %v579 = vpack.c.b16 %v395, %v393
    %v580 = vpack.c.b16 %v396, %v394
    %v581 = vpack.c.b16 %v399, %v397
    %v582 = vpack.c.b16 %v400, %v398
    %v583 = vpack.c.b16 %v403, %v401
    %v584 = vpack.c.b16 %v404, %v402
    %v585 = vpack.c.b16 %v407, %v405
    %v586 = vpack.c.b16 %v408, %v406
    %v587 = vpack.c.b16 %v411, %v409
    %v588 = vpack.c.b16 %v412, %v410
    %v589 = vpack.c.b16 %v415, %v413
    %v590 = vpack.c.b16 %v416, %v414
    %v591 = vpack.c.b16 %v419, %v417
    %v592 = vpack.c.b16 %v420, %v418
    %v593 = vpack.c.b16 %v423, %v421
    %v594 = vpack.c.b16 %v424, %v422
    %v595 = vpack.c.b16 %v427, %v425
    %v596 = vpack.c.b16 %v428, %v426
    %v597 = vpack.c.b16 %v431, %v429
    %v598 = vpack.c.b16 %v432, %v430
    %v599 = vpack.c.b16 %v435, %v433
    %v600 = vpack.c.b16 %v436, %v434
    %v601 = vpack.c.b16 %v439, %v437
    %v602 = vpack.c.b16 %v440, %v438
    %v603 = vpack.c.b16 %v443, %v441
    %v604 = vpack.c.b16 %v444, %v442
    %v605 = vpack.c.b16 %v447, %v445
    %v606 = vpack.c.b16 %v448, %v446
    %v607 = vpack.c.b16 %v451, %v449
    %v608 = vpack.c.b16 %v452, %v450
    %v609 = vpack.c.b16 %v455, %v453
    %v610 = vpack.c.b16 %v456, %v454
    %v611 = vpack.c.b16 %v459, %v457
    %v612 = vpack.c.b16 %v460, %v458
    %v613 = vpack.c.b16 %v463, %v461
    %v614 = vpack.c.b16 %v464, %v462
    %v615 = vpack.c.b16 %v467, %v465
    %v616 = vpack.c.b16 %v468, %v466
    %v617 = vpack.c.b16 %v471, %v469
    %v618 = vpack.c.b16 %v472, %v470
    %v619 = vpack.c.b16 %v475, %v473
    %v620 = vpack.c.b16 %v476, %v474
    %v621 = vpack.c.b16 %v479, %v477
    %v622 = vpack.c.b16 %v480, %v478
    %v623 = vpack.c.b16 %v483, %v481
    %v624 = vpack.c.b16 %v484, %v482
    %v625 = vpack.c.b16 %v487, %v485
    %v626 = vpack.c.b16 %v488, %v486
    %v627 = vpack.c.b16 %v491, %v489
    %v628 = vpack.c.b16 %v492, %v490
    %v629 = vpack.c.b16 %v495, %v493
    %v630 = vpack.c.b16 %v496, %v494
    %v631 = vpack.c.b16 %v499, %v497
    %v632 = vpack.c.b16 %v500, %v498
    %v633 = vpack.c.b16 %v503, %v501
    %v634 = vpack.c.b16 %v504, %v502
    %v635 = vpack.c.b16 %v507, %v505
    %v636 = vpack.c.b16 %v508, %v506
    %v637 = vpack.c.b16 %v511, %v509
    %v638 = vpack.c.b16 %v512, %v510
    %v639 = vpack.c.b16 %v515, %v513
    %v640 = vpack.c.b16 %v516, %v514
    %v641 = vpack.c.b16 %v519, %v517
    %v642 = vpack.c.b16 %v520, %v518
    %v643 = vpack.c.b16 %v523, %v521
    %v644 = vpack.c.b16 %v524, %v522
    %v645 = vpack.c.b16 %v527, %v525
    %v646 = vpack.c.b16 %v528, %v526
    %v647 = vpack.c.b16 %v531, %v529
    %v648 = vpack.c.b16 %v532, %v530
    %v649 = vpack.c.b16 %v535, %v533
    %v650 = vpack.c.b16 %v536, %v534
    %v651 = vpack.c.b16 %v539, %v537
    %v652 = vpack.c.b16 %v540, %v538
    %v653 = vpack.c.b16 %v543, %v541
    %v654 = vpack.c.b16 %v544, %v542
    %v655 = vpack.c.b16 %v547, %v545
    %v656 = vpack.c.b16 %v548, %v546
    %v657 = vpack.c.b16 %v551, %v549
    %v658 = vpack.c.b16 %v552, %v550
    %v659 = vpack.c.b16 %v555, %v553
    %v660 = vpack.c.b16 %v556, %v554
    %v661 = vpack.c.b16 %v559, %v557
    %v662 = vpack.c.b16 %v560, %v558
    %v663 = vpack.c.b16 %v563, %v561
    %v664 = vpack.c.b16 %v564, %v562
    %v665 = vpack.c.b16 %v567, %v565
    %v666 = vpack.c.b16 %v568, %v566
    %vm765 = vcmask 130048
    %v767 = vsel %vm765, %v112, 0
    %769 = vmatprep.subr.bf16.mxu0 %v584
    %770 = vmatpush1.bf16.msra.mxu0 %v583
    %771 = vmatprep.subr.bf16.mxu0 %v582
    %772 = vmatpush1.bf16.msra.mxu0 %v581
    %773 = vmatprep.subr.bf16.mxu0 %v580
    %774 = vmatpush1.bf16.msra.mxu0 %v579
    %775 = vmatprep.subr.bf16.mxu0 %v578
    %776 = vmatpush1.bf16.msra.mxu0 %v577
    %777 = vmatprep.subr.bf16.mxu0 %v576
    %778 = vmatpush1.bf16.msra.mxu0 %v575
    %779 = vmatprep.subr.bf16.mxu0 %v574
    %780 = vmatpush1.bf16.msra.mxu0 %v573
    %781 = vmatprep.subr.bf16.mxu0 %v572
    %782 = vmatpush1.bf16.msra.mxu0 %v571
    %783 = vmatprep.subr.bf16.mxu0 %v570
    %784 = vmatpush1.bf16.msra.mxu0 %v569
    %785 = vmatprep.subr.bf16.mxu0 %v600
    %786 = vmatpush2.bf16.msra.mxu0 %v599
    %787 = vmatprep.subr.bf16.mxu0 %v598
    %788 = vmatpush2.bf16.msra.mxu0 %v597
    %789 = vmatprep.subr.bf16.mxu0 %v596
    %790 = vmatpush2.bf16.msra.mxu0 %v595
    %791 = vmatprep.subr.bf16.mxu0 %v594
    %792 = vmatpush2.bf16.msra.mxu0 %v593
    %793 = vmatprep.subr.bf16.mxu0 %v592
    %794 = vmatpush2.bf16.msra.mxu0 %v591
    %795 = vmatprep.subr.bf16.mxu0 %v590
    %796 = vmatpush2.bf16.msra.mxu0 %v589
    %797 = vmatprep.subr.bf16.mxu0 %v588
    %798 = vmatpush2.bf16.msra.mxu0 %v587
    %799 = vmatprep.subr.bf16.mxu0 %v586
    %800 = vmatpush2.bf16.msra.mxu0 %v585
    %801 = vmatprep.mubr.bf16.mxu0 %v107
    %802 = vmatmul.mubr.bf16.gmra.mxu0 %v106
    %v803 = vpop.f32.mrf.mxu0
    %v804 = vadd.f32 %v269, %v803
    %v805 = vpop.f32.mrf.mxu0
    %v806 = vadd.f32 %v271, %v805
    %v807 = vpop.f32.mrf.mxu0
    %v808 = vpop.f32.mrf.mxu0
    %809 = vdwg.mxu0
    %810 = vmatprep.subr.bf16.mxu0 %v616
    %811 = vmatpush1.bf16.msra.mxu0 %v615
    %812 = vmatprep.subr.bf16.mxu0 %v614
    %813 = vmatpush1.bf16.msra.mxu0 %v613
    %814 = vmatprep.subr.bf16.mxu0 %v612
    %815 = vmatpush1.bf16.msra.mxu0 %v611
    %816 = vmatprep.subr.bf16.mxu0 %v610
    %817 = vmatpush1.bf16.msra.mxu0 %v609
    %818 = vmatprep.subr.bf16.mxu0 %v608
    %819 = vmatpush1.bf16.msra.mxu0 %v607
    %820 = vmatprep.subr.bf16.mxu0 %v606
    %821 = vmatpush1.bf16.msra.mxu0 %v605
    %822 = vmatprep.subr.bf16.mxu0 %v604
    %823 = vmatpush1.bf16.msra.mxu0 %v603
    %824 = vmatprep.subr.bf16.mxu0 %v602
    %825 = vmatpush1.bf16.msra.mxu0 %v601
    %826 = vmatprep.subr.bf16.mxu0 %v632
    %827 = vmatpush2.bf16.msra.mxu0 %v631
    %828 = vmatprep.subr.bf16.mxu0 %v630
    %829 = vmatpush2.bf16.msra.mxu0 %v629
    %830 = vmatprep.subr.bf16.mxu0 %v628
    %831 = vmatpush2.bf16.msra.mxu0 %v627
    %832 = vmatprep.subr.bf16.mxu0 %v626
    %833 = vmatpush2.bf16.msra.mxu0 %v625
    %834 = vmatprep.subr.bf16.mxu0 %v624
    %835 = vmatpush2.bf16.msra.mxu0 %v623
    %836 = vmatprep.subr.bf16.mxu0 %v622
    %837 = vmatpush2.bf16.msra.mxu0 %v621
    %838 = vmatprep.subr.bf16.mxu0 %v620
    %839 = vmatpush2.bf16.msra.mxu0 %v619
    %840 = vmatprep.subr.bf16.mxu0 %v618
    %841 = vmatpush2.bf16.msra.mxu0 %v617
    %842 = vmatprep.mubr.bf16.mxu0 %v109
    %843 = vmatmul.mubr.bf16.gmra.mxu0 %v108
    %v844 = vpop.f32.mrf.mxu0
    %v845 = vadd.f32 %v804, %v844
    %v846 = vpop.f32.mrf.mxu0
    %v847 = vadd.f32 %v806, %v846
    %v848 = vpop.f32.mrf.mxu0
    %v849 = vpop.f32.mrf.mxu0
    %850 = vdwg.mxu0
    %851 = vmatprep.subr.bf16.mxu0 %v648
    %852 = vmatpush1.bf16.msra.mxu0 %v647
    %853 = vmatprep.subr.bf16.mxu0 %v646
    %854 = vmatpush1.bf16.msra.mxu0 %v645
    %855 = vmatprep.subr.bf16.mxu0 %v644
    %856 = vmatpush1.bf16.msra.mxu0 %v643
    %857 = vmatprep.subr.bf16.mxu0 %v642
    %858 = vmatpush1.bf16.msra.mxu0 %v641
    %859 = vmatprep.subr.bf16.mxu0 %v640
    %860 = vmatpush1.bf16.msra.mxu0 %v639
    %861 = vmatprep.subr.bf16.mxu0 %v638
    %862 = vmatpush1.bf16.msra.mxu0 %v637
    %863 = vmatprep.subr.bf16.mxu0 %v636
    %864 = vmatpush1.bf16.msra.mxu0 %v635
    %865 = vmatprep.subr.bf16.mxu0 %v634
    %866 = vmatpush1.bf16.msra.mxu0 %v633
    %867 = vmatprep.subr.bf16.mxu0 %v664
    %868 = vmatpush2.bf16.msra.mxu0 %v663
    %869 = vmatprep.subr.bf16.mxu0 %v662
    %870 = vmatpush2.bf16.msra.mxu0 %v661
    %871 = vmatprep.subr.bf16.mxu0 %v660
    %872 = vmatpush2.bf16.msra.mxu0 %v659
    %873 = vmatprep.subr.bf16.mxu0 %v658
    %874 = vmatpush2.bf16.msra.mxu0 %v657
    %875 = vmatprep.subr.bf16.mxu0 %v656
    %876 = vmatpush2.bf16.msra.mxu0 %v655
    %877 = vmatprep.subr.bf16.mxu0 %v654
    %878 = vmatpush2.bf16.msra.mxu0 %v653
    %879 = vmatprep.subr.bf16.mxu0 %v652
    %880 = vmatpush2.bf16.msra.mxu0 %v651
    %881 = vmatprep.subr.bf16.mxu0 %v650
    %882 = vmatpush2.bf16.msra.mxu0 %v649
    %883 = vmatprep.mubr.bf16.mxu0 %v111
    %884 = vmatmul.mubr.bf16.gmra.mxu0 %v110
    %v885 = vpop.f32.mrf.mxu0
    %v886 = vadd.f32 %v845, %v885
    %v887 = vpop.f32.mrf.mxu0
    %v888 = vadd.f32 %v847, %v887
    %v889 = vpop.f32.mrf.mxu0
    %v890 = vpop.f32.mrf.mxu0
    %891 = vdwg.mxu0
    %892 = vmatprep.subr.bf16.mxu0 0
    %893 = vmatpush1.bf16.msra.mxu0 0
    %894 = vmatprep.subr.bf16.mxu0 0
    %895 = vmatpush1.bf16.msra.mxu0 0
    %896 = vmatprep.subr.bf16.mxu0 0
    %897 = vmatpush1.bf16.msra.mxu0 0
    %898 = vmatprep.subr.bf16.mxu0 0
    %899 = vmatpush1.bf16.msra.mxu0 0
    %900 = vmatprep.subr.bf16.mxu0 0
    %901 = vmatpush1.bf16.msra.mxu0 0
    %902 = vmatprep.subr.bf16.mxu0 0
    %903 = vmatpush1.bf16.msra.mxu0 0
    %904 = vmatprep.subr.bf16.mxu0 0
    %905 = vmatpush1.bf16.msra.mxu0 0
    %906 = vmatprep.subr.bf16.mxu0 %v666
    %907 = vmatpush1.bf16.msra.mxu0 %v665
    %908 = vmatprep.subr.bf16.mxu0 0
    %909 = vmatpush2.bf16.msra.mxu0 0
    %910 = vmatprep.subr.bf16.mxu0 0
    %911 = vmatpush2.bf16.msra.mxu0 0
    %912 = vmatprep.subr.bf16.mxu0 0
    %913 = vmatpush2.bf16.msra.mxu0 0
    %914 = vmatprep.subr.bf16.mxu0 0
    %915 = vmatpush2.bf16.msra.mxu0 0
    %916 = vmatprep.subr.bf16.mxu0 0
    %917 = vmatpush2.bf16.msra.mxu0 0
    %918 = vmatprep.subr.bf16.mxu0 0
    %919 = vmatpush2.bf16.msra.mxu0 0
    %920 = vmatprep.subr.bf16.mxu0 0
    %921 = vmatpush2.bf16.msra.mxu0 0
    %922 = vmatprep.subr.bf16.mxu0 0
    %923 = vmatpush2.bf16.msra.mxu0 0
    %924 = vmatprep.mubr.bf16.mxu0 0
    %925 = vmatmul.mubr.bf16.gmra.mxu0 %v767
    %v926 = vpop.f32.mrf.mxu0
    %v927 = vadd.f32 %v886, %v926
    %v928 = vpop.f32.mrf.mxu0
    %v929 = vadd.f32 %v888, %v928
    %v930 = vpop.f32.mrf.mxu0
    %v931 = vpop.f32.mrf.mxu0
    %932 = vdwg.mxu0
    %v933 = vld [vmem:[%s4] sm:$0x3]
    %v935 = vlaneseq
    %v936 = vshrl.u32 %v935, 7
    %v937 = vsub.s32 0, %v936
    %v938 = vrot.slane %v933, %v937
    %v939 = vlaneseq
    %v940 = vshrl.u32 %v939, 7
    %v941 = vsub.s32 1, %v940
    %v942 = vrot.slane %v933, %v941
    %v945 = vadd.f32 %v927, %v938
    %v946 = vadd.f32 %v929, %v942
    %vm947 = vcmp.gt.f32.partialorder %v945, 0.0
    %vm948 = vcmp.gt.f32.partialorder %v946, 0.0
    %v949 = vmul.f32 %v945, 0.2
    %v950 = vmul.f32 %v946, 0.2
    %v951 = vsel %vm947, %v945, %v949
    %v952 = vsel %vm948, %v946, %v950
    %v953 = vpack.c.bf16 %v951, %v951
    %v954 = vpack.c.bf16 %v952, %v952
    %v955 = vld [vmem:[#allocation11] sm:$0xff]
    %v956 = vld [vmem:[#allocation11 + $0x8] sm:$0xff]
    %v957 = vld [vmem:[#allocation11 + $0x10] sm:$0xff]
    %v958 = vld [vmem:[#allocation11 + $0x18] sm:$0xff]
    %v959 = vld [vmem:[#allocation11 + $0x20] sm:$0xff]
    %v960 = vld [vmem:[#allocation11 + $0x28] sm:$0xff]
    %v961 = vld [vmem:[#allocation11 + $0x30] sm:$0xff]
    %v962 = vld [vmem:[#allocation11 + $0x38] sm:$0xff]
    %v963 = vld [vmem:[#allocation11 + $0x40] sm:$0xff]
    %v964 = vld [vmem:[#allocation11 + $0x48] sm:$0xff]
    %v965 = vld [vmem:[#allocation11 + $0x50] sm:$0xff]
    %v966 = vld [vmem:[#allocation11 + $0x58] sm:$0xff]
    %v967 = vld [vmem:[#allocation11 + $0x60] sm:$0xff]
    %v968 = vld [vmem:[#allocation11 + $0x68] sm:$0xff]
    %v969 = vld [vmem:[#allocation11 + $0x70] sm:$0xff]
    %v970 = vld [vmem:[#allocation11 + $0x78] sm:$0xff]
    %v971 = vld [vmem:[#allocation11 + $0x80] sm:$0xff]
    %v972 = vld [vmem:[#allocation11 + $0x88] sm:$0xff]
    %v973 = vld [vmem:[#allocation11 + $0x90] sm:$0xff]
    %v974 = vld [vmem:[#allocation11 + $0x98] sm:$0xff]
    %v975 = vld [vmem:[#allocation11 + $0xa0] sm:$0xff]
    %v976 = vld [vmem:[#allocation11 + $0xa8] sm:$0xff]
    %v977 = vld [vmem:[#allocation11 + $0xb0] sm:$0xff]
    %v978 = vld [vmem:[#allocation11 + $0xb8] sm:$0xff]
    %v979 = vld [vmem:[#allocation11 + $0xc0] sm:$0xff]
    %v980 = vld [vmem:[#allocation11 + $0xc8] sm:$0xff]
    %v981 = vld [vmem:[#allocation11 + $0xd0] sm:$0xff]
    %v982 = vld [vmem:[#allocation11 + $0xd8] sm:$0xff]
    %v983 = vld [vmem:[#allocation11 + $0xe0] sm:$0xff]
    %v984 = vld [vmem:[#allocation11 + $0xe8] sm:$0xff]
    %v985 = vld [vmem:[#allocation11 + $0xf0] sm:$0xff]
    %v986 = vld [vmem:[#allocation11 + $0xf8] sm:$0xff]
    %v987 = vld [vmem:[%s6] sm:$0x3]
    %v989 = vlaneseq
    %v990 = vshrl.u32 %v989, 7
    %v991 = vsub.s32 0, %v990
    %v992 = vrot.slane %v987, %v991
    %v993 = vlaneseq
    %v994 = vshrl.u32 %v993, 7
    %v995 = vsub.s32 1, %v994
    %v996 = vrot.slane %v987, %v995
    %v1031 = vunpack.c.l.b16 %v955
    %v1032 = vunpack.c.h.b16 %v955
    %v1033 = vunpack.c.l.b16 %v956
    %v1034 = vunpack.c.h.b16 %v956
    %v1035 = vunpack.c.l.b16 %v957
    %v1036 = vunpack.c.h.b16 %v957
    %v1037 = vunpack.c.l.b16 %v958
    %v1038 = vunpack.c.h.b16 %v958
    %v1039 = vunpack.c.l.b16 %v959
    %v1040 = vunpack.c.h.b16 %v959
    %v1041 = vunpack.c.l.b16 %v960
    %v1042 = vunpack.c.h.b16 %v960
    %v1043 = vunpack.c.l.b16 %v961
    %v1044 = vunpack.c.h.b16 %v961
    %v1045 = vunpack.c.l.b16 %v962
    %v1046 = vunpack.c.h.b16 %v962
    %v1047 = vunpack.c.l.b16 %v963
    %v1048 = vunpack.c.h.b16 %v963
    %v1049 = vunpack.c.l.b16 %v964
    %v1050 = vunpack.c.h.b16 %v964
    %v1051 = vunpack.c.l.b16 %v965
    %v1052 = vunpack.c.h.b16 %v965
    %v1053 = vunpack.c.l.b16 %v966
    %v1054 = vunpack.c.h.b16 %v966
    %v1055 = vunpack.c.l.b16 %v967
    %v1056 = vunpack.c.h.b16 %v967
    %v1057 = vunpack.c.l.b16 %v968
    %v1058 = vunpack.c.h.b16 %v968
    %v1059 = vunpack.c.l.b16 %v969
    %v1060 = vunpack.c.h.b16 %v969
    %v1061 = vunpack.c.l.b16 %v970
    %v1062 = vunpack.c.h.b16 %v970
    %v1063 = vunpack.c.l.b16 %v971
    %v1064 = vunpack.c.h.b16 %v971
    %v1065 = vunpack.c.l.b16 %v972
    %v1066 = vunpack.c.h.b16 %v972
    %v1067 = vunpack.c.l.b16 %v973
    %v1068 = vunpack.c.h.b16 %v973
    %v1069 = vunpack.c.l.b16 %v974
    %v1070 = vunpack.c.h.b16 %v974
    %v1071 = vunpack.c.l.b16 %v975
    %v1072 = vunpack.c.h.b16 %v975
    %v1073 = vunpack.c.l.b16 %v976
    %v1074 = vunpack.c.h.b16 %v976
    %v1075 = vunpack.c.l.b16 %v977
    %v1076 = vunpack.c.h.b16 %v977
    %v1077 = vunpack.c.l.b16 %v978
    %v1078 = vunpack.c.h.b16 %v978
    %v1079 = vunpack.c.l.b16 %v979
    %v1080 = vunpack.c.h.b16 %v979
    %v1081 = vunpack.c.l.b16 %v980
    %v1082 = vunpack.c.h.b16 %v980
    %v1083 = vunpack.c.l.b16 %v981
    %v1084 = vunpack.c.h.b16 %v981
    %v1085 = vunpack.c.l.b16 %v982
    %v1086 = vunpack.c.h.b16 %v982
    %v1087 = vunpack.c.l.b16 %v983
    %v1088 = vunpack.c.h.b16 %v983
    %v1089 = vunpack.c.l.b16 %v984
    %v1090 = vunpack.c.h.b16 %v984
    %v1091 = vunpack.c.l.b16 %v985
    %v1092 = vunpack.c.h.b16 %v985
    %v1093 = vunpack.c.l.b16 %v986
    %v1094 = vunpack.c.h.b16 %v986
    %v1095 = vpack.c.b16 %v1033, %v1031
    %v1096 = vpack.c.b16 %v1034, %v1032
    %v1097 = vpack.c.b16 %v1037, %v1035
    %v1098 = vpack.c.b16 %v1038, %v1036
    %v1099 = vpack.c.b16 %v1041, %v1039
    %v1100 = vpack.c.b16 %v1042, %v1040
    %v1101 = vpack.c.b16 %v1045, %v1043
    %v1102 = vpack.c.b16 %v1046, %v1044
    %v1103 = vpack.c.b16 %v1049, %v1047
    %v1104 = vpack.c.b16 %v1050, %v1048
    %v1105 = vpack.c.b16 %v1053, %v1051
    %v1106 = vpack.c.b16 %v1054, %v1052
    %v1107 = vpack.c.b16 %v1057, %v1055
    %v1108 = vpack.c.b16 %v1058, %v1056
    %v1109 = vpack.c.b16 %v1061, %v1059
    %v1110 = vpack.c.b16 %v1062, %v1060
    %v1111 = vpack.c.b16 %v1065, %v1063
    %v1112 = vpack.c.b16 %v1066, %v1064
    %v1113 = vpack.c.b16 %v1069, %v1067
    %v1114 = vpack.c.b16 %v1070, %v1068
    %v1115 = vpack.c.b16 %v1073, %v1071
    %v1116 = vpack.c.b16 %v1074, %v1072
    %v1117 = vpack.c.b16 %v1077, %v1075
    %v1118 = vpack.c.b16 %v1078, %v1076
    %v1119 = vpack.c.b16 %v1081, %v1079
    %v1120 = vpack.c.b16 %v1082, %v1080
    %v1121 = vpack.c.b16 %v1085, %v1083
    %v1122 = vpack.c.b16 %v1086, %v1084
    %v1123 = vpack.c.b16 %v1089, %v1087
    %v1124 = vpack.c.b16 %v1090, %v1088
    %v1125 = vpack.c.b16 %v1093, %v1091
    %v1126 = vpack.c.b16 %v1094, %v1092
    %1159 = vmatprep.subr.bf16.mxu0 %v1110
    %1160 = vmatpush1.bf16.msra.mxu0 %v1109
    %1161 = vmatprep.subr.bf16.mxu0 %v1108
    %1162 = vmatpush1.bf16.msra.mxu0 %v1107
    %1163 = vmatprep.subr.bf16.mxu0 %v1106
    %1164 = vmatpush1.bf16.msra.mxu0 %v1105
    %1165 = vmatprep.subr.bf16.mxu0 %v1104
    %1166 = vmatpush1.bf16.msra.mxu0 %v1103
    %1167 = vmatprep.subr.bf16.mxu0 %v1102
    %1168 = vmatpush1.bf16.msra.mxu0 %v1101
    %1169 = vmatprep.subr.bf16.mxu0 %v1100
    %1170 = vmatpush1.bf16.msra.mxu0 %v1099
    %1171 = vmatprep.subr.bf16.mxu0 %v1098
    %1172 = vmatpush1.bf16.msra.mxu0 %v1097
    %1173 = vmatprep.subr.bf16.mxu0 %v1096
    %1174 = vmatpush1.bf16.msra.mxu0 %v1095
    %1175 = vmatprep.subr.bf16.mxu0 %v1126
    %1176 = vmatpush2.bf16.msra.mxu0 %v1125
    %1177 = vmatprep.subr.bf16.mxu0 %v1124
    %1178 = vmatpush2.bf16.msra.mxu0 %v1123
    %1179 = vmatprep.subr.bf16.mxu0 %v1122
    %1180 = vmatpush2.bf16.msra.mxu0 %v1121
    %1181 = vmatprep.subr.bf16.mxu0 %v1120
    %1182 = vmatpush2.bf16.msra.mxu0 %v1119
    %1183 = vmatprep.subr.bf16.mxu0 %v1118
    %1184 = vmatpush2.bf16.msra.mxu0 %v1117
    %1185 = vmatprep.subr.bf16.mxu0 %v1116
    %1186 = vmatpush2.bf16.msra.mxu0 %v1115
    %1187 = vmatprep.subr.bf16.mxu0 %v1114
    %1188 = vmatpush2.bf16.msra.mxu0 %v1113
    %1189 = vmatprep.subr.bf16.mxu0 %v1112
    %1190 = vmatpush2.bf16.msra.mxu0 %v1111
    %1191 = vmatprep.mubr.bf16.mxu0 %v954
    %1192 = vmatmul.mubr.bf16.gmra.mxu0 %v953
    %v1193 = vpop.f32.mrf.mxu0
    %v1194 = vadd.f32 %v992, %v1193
    %v1195 = vpop.f32.mrf.mxu0
    %v1196 = vadd.f32 %v996, %v1195
    %v1197 = vpop.f32.mrf.mxu0
    %v1198 = vpop.f32.mrf.mxu0
    %1199 = vdwg.mxu0
    %vm1200 = vcmp.gt.f32.partialorder %v1194, 0.0
    %vm1201 = vcmp.gt.f32.partialorder %v1196, 0.0
    %v1202 = vmul.f32 %v1194, 0.2
    %v1203 = vmul.f32 %v1196, 0.2
    %v1204 = vsel %vm1200, %v1194, %v1202
    %v1205 = vsel %vm1201, %v1196, %v1203
    %v1206 = vld [vmem:[%s7] sm:$0x3]
    %v1208 = vlaneseq
    %v1209 = vshrl.u32 %v1208, 7
    %v1210 = vsub.s32 0, %v1209
    %v1211 = vrot.slane %v1206, %v1210
    %v1212 = vlaneseq
    %v1213 = vshrl.u32 %v1212, 7
    %v1214 = vsub.s32 1, %v1213
    %v1215 = vrot.slane %v1206, %v1214
    %v1218 = vmul.f32 %v1204, %v1211
    %v1219 = vmul.f32 %v1205, %v1215
    %v1220 = vadd.f32 %v1218, %v1219
    %1221 = vadd.xlane.f32.xlu0 %v1220
    %v1222 = vpop.xlane.xlu0 %1221
    %s1223 = sld [smem:[#allocation2]]
    %v1224 = vstv %s1223
    %v1225 = vadd.f32 %v1222, %v1224
    %v1227 = vlaneseq
    %v1228 = vand.u32 %v1227, 127
    %v1229 = vlaneseq
    %v1230 = vshrl.u32 %v1229, 7
    %v1231 = vsub.s32 %v1228, %v1230
    %v1232 = vrot.slane %v1225, %v1231
    %vm1234 = vcmask 57344
    %1235 = vst.msk [vmem:[#allocation12] sm:$0x1] %vm1234, %v1232
    // Predicated region
    $region58: #{tpu_custom_call.1} parent=1 // pred_check
      _
    $region59: #{tpu_custom_call.1} parent=1 // pred_check_branch
      %1237 = sbr.rel (0) target = $region61
    $region60: #{tpu_custom_call.1} parent=1 // pred_region
      %s1239 = ssub.s32 16, 16
      %1240 = vsyncadd [#allocation5], %s1239
      %s1242 = sshll.u32 [#allocation12], 4
      %s1243 = int_to_ptr.vmem [resolvable:$true] %s1242
      %1245 = dma.vmem_to_hbm [thread:$0]  %s1243, 16, %s9, [#allocation5]
    $region61: #{tpu_custom_call.1} parent=1 // pred_fallthru
      _
    // Predicated region
    $region62: #{tpu_custom_call.1} parent=1 // pred_check
      _
    $region63: #{tpu_custom_call.1} parent=1 // pred_check_branch
      %1247 = sbr.rel (0) target = $region65
    $region64: #{tpu_custom_call.1} parent=1 // pred_region
      %1248 = dma.done [#allocation5], 16
    $region65: #{tpu_custom_call.1} parent=1 // pred_fallthru
      _
    %1249 = vsyncpa [#allocation4], 1
    %1250 = vsyncpa [#allocation7], 1
    %1251 = vsyncpa [#allocation10], 1
    %1252 = vsyncpa [#allocation5], 1

</llo_original>
